<compile_context>
chip_gen: v7x
topology: tpu7x:2x2x1
jax: 0.10.0
libtpu: 0.0.40
codegen_flags: <defaults>
</compile_context>

<pallas_src>
import functools

import jax
import jax.numpy as jnp
from jax import lax
from jax.experimental import pallas as pl
from jax.experimental.pallas import tpu as pltpu


def _adsnet_kernel(x_ref, w_ref, pnt_ref, o_ref, *, alpha, num_proto, num_classes):
    # x_ref:   (B, C)   f32   flattened 1x1-conv input (bf16 cast done in-kernel)
    # w_ref:   (C, C)   bf16  conv weight, pre-transposed to (in_ch, out_ch)
    # pnt_ref: (C, P)   bf16  prototypes, pre-normalized and transposed
    # o_ref:   (B, num_classes) f32
    x = x_ref[...].astype(jnp.bfloat16)   # in-kernel cast: rides the idle VPU slot
    w = w_ref[...]

    # 1x1 conv -> bf16 MXU matmul with f32 accumulation, then sigmoid (EUP).
    y = jnp.dot(x, w, preferred_element_type=jnp.float32)               # (B, C) f32
    y = jax.nn.sigmoid(y)

    # cosine distances: (y / ||y||) @ pn^T == (y @ pn^T) * rsqrt(sum(y*y)).
    # Second matmul in bf16 (f32 accumulation); normalization stays f32 and is
    # applied to the 30-lane cls tile instead of the 512-lane y.
    cls = jnp.dot(y.astype(jnp.bfloat16), pnt_ref[...],
                  preferred_element_type=jnp.float32)                   # (B, P) f32
    inv_norm = lax.rsqrt(jnp.maximum(jnp.sum(y * y, axis=-1, keepdims=True), 1e-24))
    cls = cls * inv_norm

    # view(-1, num_proto, num_classes).max(dim=1):
    # proto index p maps to column p * num_classes + c  -> max over static slices.
    score = cls[:, 0:num_classes]
    for k in range(1, num_proto):
        score = jnp.maximum(score, cls[:, k * num_classes:(k + 1) * num_classes])

    o_ref[...] = jax.nn.sigmoid(score * (1.0 / alpha))


def prepare_params(conv_weight, protos):
    """One-time parameter prep (hoisted out of the per-call forward path).

    conv_weight: (C, C, 1, 1) f32   ->  (C_in, C_out) bf16
    protos:      (P, C)       f32   ->  (C, P) bf16, rows pre-normalized (f32 math)
    """
    C = conv_weight.shape[0]
    w_t = jnp.asarray(conv_weight).reshape(C, C).T.astype(jnp.bfloat16)
    pn = protos / jnp.maximum(jnp.linalg.norm(protos, axis=1, keepdims=True), 1e-12)
    pn_t = jnp.asarray(pn, dtype=jnp.float32).T.astype(jnp.bfloat16)
    return w_t, pn_t


@functools.partial(jax.jit, static_argnames=("alpha", "num_proto", "num_classes"))
def adsnet_classifier_forward(x_nchw, w_t_bf16, pn_t_bf16, *,
                              alpha=0.05, num_proto=3, num_classes=10):
    """x_nchw: (B, C, 1, 1) f32; w_t_bf16: (C, C) bf16; pn_t_bf16: (C, P) bf16."""
    B, C, H, W = x_nchw.shape
    assert H == 1 and W == 1, "ADSNet_classifier expects globally-pooled 1x1 features"
    P = num_proto * num_classes
    assert pn_t_bf16.shape == (C, P)

    # Metadata-only view on contiguous NCHW; the dtype cast happens in-kernel.
    x2d = x_nchw.reshape(B, C)

    kernel = functools.partial(
        _adsnet_kernel, alpha=alpha, num_proto=num_proto, num_classes=num_classes)

    # Advisory cost so XLA can overlap this tiny head with surrounding ops.
    cost = pl.CostEstimate(
        flops=2 * B * C * C + 2 * B * C * P,
        transcendentals=B * C + B + B * num_classes,     # sigmoid(y), rsqrt, sigmoid(out)
        bytes_accessed=(B * C * 4) + (C * C * 2) + (C * P * 2) + (B * num_classes * 4),
    )

    vmem = pl.BlockSpec(memory_space=pltpu.MemorySpace.VMEM)
    return pl.pallas_call(
        kernel,
        out_shape=jax.ShapeDtypeStruct((B, num_classes), jnp.float32),
        in_specs=[vmem, vmem, vmem],
        out_specs=vmem,
        cost_estimate=cost,
    )(x2d, w_t_bf16, pn_t_bf16)


def _reference_forward(x_nchw, conv_weight, protos, *,
                       alpha=0.05, num_proto=3, num_classes=10):
    B, C, _, _ = x_nchw.shape
    x = x_nchw.reshape(B, C)
    y = jax.nn.sigmoid(x @ conv_weight.reshape(C, C).T)
    yn = y / jnp.maximum(jnp.linalg.norm(y, axis=1, keepdims=True), 1e-12)
    pn = protos / jnp.maximum(jnp.linalg.norm(protos, axis=1, keepdims=True), 1e-12)
    cls = (yn @ pn.T).reshape(B, num_proto, num_classes).max(axis=1)
    return jax.nn.sigmoid(cls / alpha)


if __name__ == "__main__":
    # Module defaults: channels = 512 * block_expansion, num_proto=3, num_classes=10.
    B, C = 8, 512
    NUM_PROTO, NUM_CLASSES, ALPHA = 3, 10, 0.05

    key = jax.random.PRNGKey(0)
    kx, kw, kp = jax.random.split(key, 3)

    x = jax.random.normal(kx, (B, C, 1, 1), dtype=jnp.float32)          # NCHW, 1x1 spatial
    conv_w = jax.random.normal(kw, (C, C, 1, 1), dtype=jnp.float32) * (1.0 / jnp.sqrt(C))
    protos = jax.random.normal(kp, (NUM_PROTO * NUM_CLASSES, C), dtype=jnp.float32)

    # One-time parameter layout/normalization (outside the per-call path).
    w_t_bf16, pn_t_bf16 = prepare_params(conv_w, protos)

    out = adsnet_classifier_forward(
        x, w_t_bf16, pn_t_bf16, alpha=ALPHA, num_proto=NUM_PROTO, num_classes=NUM_CLASSES)
    out = jax.block_until_ready(out)

    ref = _reference_forward(
        x, conv_w, protos, alpha=ALPHA, num_proto=NUM_PROTO, num_classes=NUM_CLASSES)
    assert out.shape == (B, NUM_CLASSES)
    # bf16 weights/activations for both matmuls + 1/alpha = 20x pre-sigmoid error
    # amplification: validated against the f32 reference with a loosened tolerance
    # (measured max err ~1e-2; f32 accumulation and f32 rsqrt keep it bounded).
    max_err = float(jnp.max(jnp.abs(out - ref)))
    assert jnp.allclose(out, ref, atol=5e-2, rtol=0.0), f"max abs err = {max_err}"

    print("KERNEL_OK")
</pallas_src>

<mosaic_0001>
module attributes {stable_mosaic.version = 11 : i64} {
  func.func @_adsnet_kernel(%arg0: memref<8x512xf32, #tpu.memory_space<vmem>>, %arg1: memref<512x512xbf16, #tpu.memory_space<vmem>>, %arg2: memref<512x30xbf16, #tpu.memory_space<vmem>>, %arg3: memref<8x10xf32, #tpu.memory_space<vmem>>) attributes {dimension_semantics = [], scalar_prefetch = 0 : i64, scratch_operands = 0 : i64, tpu.core_type = #tpu.core_type<tc>} {
    %c0 = arith.constant 0 : index
    %c0_0 = arith.constant 0 : index
    %0 = vector.load %arg0[%c0, %c0_0] : memref<8x512xf32, #tpu.memory_space<vmem>>, vector<8x512xf32>
    %1 = arith.truncf %0 : vector<8x512xf32> to vector<8x512xbf16>
    %c0_1 = arith.constant 0 : index
    %c0_2 = arith.constant 0 : index
    %2 = vector.load %arg1[%c0_1, %c0_2] : memref<512x512xbf16, #tpu.memory_space<vmem>>, vector<512x512xbf16>
    %cst = arith.constant dense<0.000000e+00> : vector<8x512xf32>
    %3 = tpu.matmul %1, %2, %cst {dimension_numbers = #tpu.dot_dimension_numbers<[1], [0], [0], [1], [0, 0, 1, 1], [], []>} : vector<8x512xbf16>, vector<512x512xbf16>, vector<8x512xf32> -> vector<8x512xf32>
    %4 = arith.negf %3 : vector<8x512xf32>
    %5 = math.exp %4 : vector<8x512xf32>
    %cst_3 = arith.constant 1.000000e+00 : f32
    %6 = vector.broadcast %cst_3 : f32 to vector<8x512xf32>
    %7 = arith.addf %6, %5 : vector<8x512xf32>
    %8 = arith.divf %6, %7 : vector<8x512xf32>
    %9 = arith.truncf %8 : vector<8x512xf32> to vector<8x512xbf16>
    %c0_4 = arith.constant 0 : index
    %c0_5 = arith.constant 0 : index
    %10 = vector.load %arg2[%c0_4, %c0_5] : memref<512x30xbf16, #tpu.memory_space<vmem>>, vector<512x30xbf16>
    %cst_6 = arith.constant dense<0.000000e+00> : vector<8x30xf32>
    %11 = tpu.matmul %9, %10, %cst_6 {dimension_numbers = #tpu.dot_dimension_numbers<[1], [0], [0], [1], [0, 0, 1, 1], [], []>} : vector<8x512xbf16>, vector<512x30xbf16>, vector<8x30xf32> -> vector<8x30xf32>
    %12 = arith.mulf %8, %8 : vector<8x512xf32>
    %cst_7 = arith.constant dense<0.000000e+00> : vector<8xf32>
    %13 = vector.multi_reduction <add>, %12, %cst_7 [1] : vector<8x512xf32> to vector<8xf32>
    %14 = vector.shape_cast %13 : vector<8xf32> to vector<8x1xf32>
    %cst_8 = arith.constant 1.000000e-24 : f32
    %15 = vector.broadcast %cst_8 : f32 to vector<8x1xf32>
    %16 = arith.maximumf %14, %15 : vector<8x1xf32>
    %17 = math.rsqrt %16 : vector<8x1xf32>
    %18 = vector.broadcast %17 : vector<8x1xf32> to vector<8x30xf32>
    %19 = arith.mulf %11, %18 : vector<8x30xf32>
    %20 = vector.extract_strided_slice %19 {offsets = [0, 0], sizes = [8, 10], strides = [1, 1]} : vector<8x30xf32> to vector<8x10xf32>
    %21 = vector.extract_strided_slice %19 {offsets = [0, 10], sizes = [8, 10], strides = [1, 1]} : vector<8x30xf32> to vector<8x10xf32>
    %22 = arith.maximumf %20, %21 : vector<8x10xf32>
    %23 = vector.extract_strided_slice %19 {offsets = [0, 20], sizes = [8, 10], strides = [1, 1]} : vector<8x30xf32> to vector<8x10xf32>
    %24 = arith.maximumf %22, %23 : vector<8x10xf32>
    %cst_9 = arith.constant 2.000000e+01 : f32
    %25 = vector.broadcast %cst_9 : f32 to vector<8x10xf32>
    %26 = arith.mulf %24, %25 : vector<8x10xf32>
    %27 = arith.negf %26 : vector<8x10xf32>
    %28 = math.exp %27 : vector<8x10xf32>
    %cst_10 = arith.constant 1.000000e+00 : f32
    %29 = vector.broadcast %cst_10 : f32 to vector<8x10xf32>
    %30 = arith.addf %29, %28 : vector<8x10xf32>
    %31 = arith.divf %29, %30 : vector<8x10xf32>
    %c0_11 = arith.constant 0 : index
    %c0_12 = arith.constant 0 : index
    %32 = vector.load %arg3[%c0_11, %c0_12] : memref<8x10xf32, #tpu.memory_space<vmem>>, vector<8x10xf32>
    tpu.vector_store %arg3[%c0_11, %c0_12], %31 {strides = array<i32>} : memref<8x10xf32, #tpu.memory_space<vmem>>, vector<8x10xf32>,
    return
  }
}

</mosaic_0001>

<llo_original>
// kernel: adsnet_classifier_forward.1
$region0: #{adsnet_classifier_forward.1}
  #allocation0 [shape = 'u32[]', space=smem, size = 0x4, offset = 0x4, fixed_abs, tag = 'smem constant byte address 0x4 - core index']
  #allocation1 [shape = 'u32[144,128]{1,0:T(1,128)}', space=vmem, size = 0x12000, scoped, tag = 'internal scratch']
  %s0 = inlined_call_operand.vmem [shape: f32[8,512], index: 0, kind: input, shape index: {}]
  %s1 = inlined_call_operand.hbm [shape: bf16[512,512], index: 1, kind: input, shape index: {}]
  %s2 = inlined_call_operand.vmem [shape: bf16[512,30], index: 2, kind: input, shape index: {}]
  %s3 = inlined_call_operand.hbm [shape: f32[8,10], index: 3, kind: output, shape index: {}]
  %s4 = sld [smem:[#allocation0]]
  $region26: #{adsnet_classifier_forward.1} parent=0
    _
  %s6 = ssub.s32 1, %s4
  %s7 = scalar_select 0, %s6, %s4
  $region1: #{adsnet_classifier_forward.1} parent=0
    #allocation2 [shape = 'u8[524288]{0}', space=vmem, size = 0x80000, scoped, tag = 'input window, operand 1, single buffered']
    #allocation3 [shape = 's32[1]{0}', space=sflag, size = 0x4, scoped, tag = 'scoped memory for adsnet_classifier_forward.1']
    #allocation4 [shape = 's32[1]{0}', space=sflag, size = 0x4, scoped, tag = 'scoped memory for adsnet_classifier_forward.1']
    #allocation5 [shape = 'u8[4096]{0}', space=vmem, size = 0x1000, scoped, tag = 'output window, operand 0, single buffered']
    %8 = vsyncpa [#allocation3], 0
    %9 = vsyncpa [#allocation4], 0
    // Predicated region
    $region2: #{adsnet_classifier_forward.1} parent=1 // pred_check
      _
    $region3: #{adsnet_classifier_forward.1} parent=1 // pred_check_branch
      %11 = sbr.rel (0) target = $region5
    $region4: #{adsnet_classifier_forward.1} parent=1 // pred_region
      _
    $region5: #{adsnet_classifier_forward.1} parent=1 // pred_fallthru
      _
    // Predicated region
    $region6: #{adsnet_classifier_forward.1} parent=1 // pred_check
      _
    $region7: #{adsnet_classifier_forward.1} parent=1 // pred_check_branch
      %13 = sbr.rel (0) target = $region9
    $region8: #{adsnet_classifier_forward.1} parent=1 // pred_region
      %s15 = ssub.s32 16384, 16384
      %16 = vsyncadd [#allocation3], %s15
      %s17 = sshll.u32 [#allocation2], 4
      %s18 = int_to_ptr.vmem [resolvable:$true] %s17
      %23 = dma.hbm_to_vmem [thread:$0]  %s1, 16384, %s18, [#allocation3], 256, 256, 16
    $region9: #{adsnet_classifier_forward.1} parent=1 // pred_fallthru
      _
    // Predicated region
    $region10: #{adsnet_classifier_forward.1} parent=1 // pred_check
      _
    $region11: #{adsnet_classifier_forward.1} parent=1 // pred_check_branch
      %25 = sbr.rel (0) target = $region13
    $region12: #{adsnet_classifier_forward.1} parent=1 // pred_region
      _
    $region13: #{adsnet_classifier_forward.1} parent=1 // pred_fallthru
      _
    // Predicated region
    $region14: #{adsnet_classifier_forward.1} parent=1 // pred_check
      _
    $region15: #{adsnet_classifier_forward.1} parent=1 // pred_check_branch
      %27 = sbr.rel (0) target = $region17
    $region16: #{adsnet_classifier_forward.1} parent=1 // pred_region
      %28 = dma.done [#allocation3], 16384
    $region17: #{adsnet_classifier_forward.1} parent=1 // pred_fallthru
      _
    %v30 = vld [vmem:[%s0] sm:$0xff]
    %v31 = vld [vmem:[%s0 + $0x8] sm:$0xff]
    %v32 = vld [vmem:[%s0 + $0x10] sm:$0xff]
    %v33 = vld [vmem:[%s0 + $0x18] sm:$0xff]
    %v34 = vpack.c.bf16 %v30, %v30
    %v35 = vpack.c.bf16 %v31, %v31
    %v36 = vpack.c.bf16 %v32, %v32
    %v37 = vpack.c.bf16 %v33, %v33
    %v38 = vld [vmem:[#allocation2] sm:$0xff]
    %v39 = vld [vmem:[#allocation2 + $0x8] sm:$0xff]
    %v40 = vld [vmem:[#allocation2 + $0x10] sm:$0xff]
    %v41 = vld [vmem:[#allocation2 + $0x18] sm:$0xff]
    %v42 = vld [vmem:[#allocation2 + $0x20] sm:$0xff]
    %v43 = vld [vmem:[#allocation2 + $0x28] sm:$0xff]
    %v44 = vld [vmem:[#allocation2 + $0x30] sm:$0xff]
    %v45 = vld [vmem:[#allocation2 + $0x38] sm:$0xff]
    %v46 = vld [vmem:[#allocation2 + $0x40] sm:$0xff]
    %v47 = vld [vmem:[#allocation2 + $0x48] sm:$0xff]
    %v48 = vld [vmem:[#allocation2 + $0x50] sm:$0xff]
    %v49 = vld [vmem:[#allocation2 + $0x58] sm:$0xff]
    %v50 = vld [vmem:[#allocation2 + $0x60] sm:$0xff]
    %v51 = vld [vmem:[#allocation2 + $0x68] sm:$0xff]
    %v52 = vld [vmem:[#allocation2 + $0x70] sm:$0xff]
    %v53 = vld [vmem:[#allocation2 + $0x78] sm:$0xff]
    %v54 = vld [vmem:[#allocation2 + $0x80] sm:$0xff]
    %v55 = vld [vmem:[#allocation2 + $0x88] sm:$0xff]
    %v56 = vld [vmem:[#allocation2 + $0x90] sm:$0xff]
    %v57 = vld [vmem:[#allocation2 + $0x98] sm:$0xff]
    %v58 = vld [vmem:[#allocation2 + $0xa0] sm:$0xff]
    %v59 = vld [vmem:[#allocation2 + $0xa8] sm:$0xff]
    %v60 = vld [vmem:[#allocation2 + $0xb0] sm:$0xff]
    %v61 = vld [vmem:[#allocation2 + $0xb8] sm:$0xff]
    %v62 = vld [vmem:[#allocation2 + $0xc0] sm:$0xff]
    %v63 = vld [vmem:[#allocation2 + $0xc8] sm:$0xff]
    %v64 = vld [vmem:[#allocation2 + $0xd0] sm:$0xff]
    %v65 = vld [vmem:[#allocation2 + $0xd8] sm:$0xff]
    %v66 = vld [vmem:[#allocation2 + $0xe0] sm:$0xff]
    %v67 = vld [vmem:[#allocation2 + $0xe8] sm:$0xff]
    %v68 = vld [vmem:[#allocation2 + $0xf0] sm:$0xff]
    %v69 = vld [vmem:[#allocation2 + $0xf8] sm:$0xff]
    %v70 = vld [vmem:[#allocation2 + $0x100] sm:$0xff]
    %v71 = vld [vmem:[#allocation2 + $0x108] sm:$0xff]
    %v72 = vld [vmem:[#allocation2 + $0x110] sm:$0xff]
    %v73 = vld [vmem:[#allocation2 + $0x118] sm:$0xff]
    %v74 = vld [vmem:[#allocation2 + $0x120] sm:$0xff]
    %v75 = vld [vmem:[#allocation2 + $0x128] sm:$0xff]
    %v76 = vld [vmem:[#allocation2 + $0x130] sm:$0xff]
    %v77 = vld [vmem:[#allocation2 + $0x138] sm:$0xff]
    %v78 = vld [vmem:[#allocation2 + $0x140] sm:$0xff]
    %v79 = vld [vmem:[#allocation2 + $0x148] sm:$0xff]
    %v80 = vld [vmem:[#allocation2 + $0x150] sm:$0xff]
    %v81 = vld [vmem:[#allocation2 + $0x158] sm:$0xff]
    %v82 = vld [vmem:[#allocation2 + $0x160] sm:$0xff]
    %v83 = vld [vmem:[#allocation2 + $0x168] sm:$0xff]
    %v84 = vld [vmem:[#allocation2 + $0x170] sm:$0xff]
    %v85 = vld [vmem:[#allocation2 + $0x178] sm:$0xff]
    %v86 = vld [vmem:[#allocation2 + $0x180] sm:$0xff]
    %v87 = vld [vmem:[#allocation2 + $0x188] sm:$0xff]
    %v88 = vld [vmem:[#allocation2 + $0x190] sm:$0xff]
    %v89 = vld [vmem:[#allocation2 + $0x198] sm:$0xff]
    %v90 = vld [vmem:[#allocation2 + $0x1a0] sm:$0xff]
    %v91 = vld [vmem:[#allocation2 + $0x1a8] sm:$0xff]
    %v92 = vld [vmem:[#allocation2 + $0x1b0] sm:$0xff]
    %v93 = vld [vmem:[#allocation2 + $0x1b8] sm:$0xff]
    %v94 = vld [vmem:[#allocation2 + $0x1c0] sm:$0xff]
    %v95 = vld [vmem:[#allocation2 + $0x1c8] sm:$0xff]
    %v96 = vld [vmem:[#allocation2 + $0x1d0] sm:$0xff]
    %v97 = vld [vmem:[#allocation2 + $0x1d8] sm:$0xff]
    %v98 = vld [vmem:[#allocation2 + $0x1e0] sm:$0xff]
    %v99 = vld [vmem:[#allocation2 + $0x1e8] sm:$0xff]
    %v100 = vld [vmem:[#allocation2 + $0x1f0] sm:$0xff]
    %v101 = vld [vmem:[#allocation2 + $0x1f8] sm:$0xff]
    %v102 = vld [vmem:[#allocation2 + $0x200] sm:$0xff]
    %v103 = vld [vmem:[#allocation2 + $0x208] sm:$0xff]
    %v104 = vld [vmem:[#allocation2 + $0x210] sm:$0xff]
    %v105 = vld [vmem:[#allocation2 + $0x218] sm:$0xff]
    %v106 = vld [vmem:[#allocation2 + $0x220] sm:$0xff]
    %v107 = vld [vmem:[#allocation2 + $0x228] sm:$0xff]
    %v108 = vld [vmem:[#allocation2 + $0x230] sm:$0xff]
    %v109 = vld [vmem:[#allocation2 + $0x238] sm:$0xff]
    %v110 = vld [vmem:[#allocation2 + $0x240] sm:$0xff]
    %v111 = vld [vmem:[#allocation2 + $0x248] sm:$0xff]
    %v112 = vld [vmem:[#allocation2 + $0x250] sm:$0xff]
    %v113 = vld [vmem:[#allocation2 + $0x258] sm:$0xff]
    %v114 = vld [vmem:[#allocation2 + $0x260] sm:$0xff]
    %v115 = vld [vmem:[#allocation2 + $0x268] sm:$0xff]
    %v116 = vld [vmem:[#allocation2 + $0x270] sm:$0xff]
    %v117 = vld [vmem:[#allocation2 + $0x278] sm:$0xff]
    %v118 = vld [vmem:[#allocation2 + $0x280] sm:$0xff]
    %v119 = vld [vmem:[#allocation2 + $0x288] sm:$0xff]
    %v120 = vld [vmem:[#allocation2 + $0x290] sm:$0xff]
    %v121 = vld [vmem:[#allocation2 + $0x298] sm:$0xff]
    %v122 = vld [vmem:[#allocation2 + $0x2a0] sm:$0xff]
    %v123 = vld [vmem:[#allocation2 + $0x2a8] sm:$0xff]
    %v124 = vld [vmem:[#allocation2 + $0x2b0] sm:$0xff]
    %v125 = vld [vmem:[#allocation2 + $0x2b8] sm:$0xff]
    %v126 = vld [vmem:[#allocation2 + $0x2c0] sm:$0xff]
    %v127 = vld [vmem:[#allocation2 + $0x2c8] sm:$0xff]
    %v128 = vld [vmem:[#allocation2 + $0x2d0] sm:$0xff]
    %v129 = vld [vmem:[#allocation2 + $0x2d8] sm:$0xff]
    %v130 = vld [vmem:[#allocation2 + $0x2e0] sm:$0xff]
    %v131 = vld [vmem:[#allocation2 + $0x2e8] sm:$0xff]
    %v132 = vld [vmem:[#allocation2 + $0x2f0] sm:$0xff]
    %v133 = vld [vmem:[#allocation2 + $0x2f8] sm:$0xff]
    %v134 = vld [vmem:[#allocation2 + $0x300] sm:$0xff]
    %v135 = vld [vmem:[#allocation2 + $0x308] sm:$0xff]
    %v136 = vld [vmem:[#allocation2 + $0x310] sm:$0xff]
    %v137 = vld [vmem:[#allocation2 + $0x318] sm:$0xff]
    %v138 = vld [vmem:[#allocation2 + $0x320] sm:$0xff]
    %v139 = vld [vmem:[#allocation2 + $0x328] sm:$0xff]
    %v140 = vld [vmem:[#allocation2 + $0x330] sm:$0xff]
    %v141 = vld [vmem:[#allocation2 + $0x338] sm:$0xff]
    %v142 = vld [vmem:[#allocation2 + $0x340] sm:$0xff]
    %v143 = vld [vmem:[#allocation2 + $0x348] sm:$0xff]
    %v144 = vld [vmem:[#allocation2 + $0x350] sm:$0xff]
    %v145 = vld [vmem:[#allocation2 + $0x358] sm:$0xff]
    %v146 = vld [vmem:[#allocation2 + $0x360] sm:$0xff]
    %v147 = vld [vmem:[#allocation2 + $0x368] sm:$0xff]
    %v148 = vld [vmem:[#allocation2 + $0x370] sm:$0xff]
    %v149 = vld [vmem:[#allocation2 + $0x378] sm:$0xff]
    %v150 = vld [vmem:[#allocation2 + $0x380] sm:$0xff]
    %v151 = vld [vmem:[#allocation2 + $0x388] sm:$0xff]
    %v152 = vld [vmem:[#allocation2 + $0x390] sm:$0xff]
    %v153 = vld [vmem:[#allocation2 + $0x398] sm:$0xff]
    %v154 = vld [vmem:[#allocation2 + $0x3a0] sm:$0xff]
    %v155 = vld [vmem:[#allocation2 + $0x3a8] sm:$0xff]
    %v156 = vld [vmem:[#allocation2 + $0x3b0] sm:$0xff]
    %v157 = vld [vmem:[#allocation2 + $0x3b8] sm:$0xff]
    %v158 = vld [vmem:[#allocation2 + $0x3c0] sm:$0xff]
    %v159 = vld [vmem:[#allocation2 + $0x3c8] sm:$0xff]
    %v160 = vld [vmem:[#allocation2 + $0x3d0] sm:$0xff]
    %v161 = vld [vmem:[#allocation2 + $0x3d8] sm:$0xff]
    %v162 = vld [vmem:[#allocation2 + $0x3e0] sm:$0xff]
    %v163 = vld [vmem:[#allocation2 + $0x3e8] sm:$0xff]
    %v164 = vld [vmem:[#allocation2 + $0x3f0] sm:$0xff]
    %v165 = vld [vmem:[#allocation2 + $0x3f8] sm:$0xff]
    %v294 = vunpack.c.l.b16 %v38
    %v295 = vunpack.c.h.b16 %v38
    %v296 = vunpack.c.l.b16 %v39
    %v297 = vunpack.c.h.b16 %v39
    %v298 = vunpack.c.l.b16 %v40
    %v299 = vunpack.c.h.b16 %v40
    %v300 = vunpack.c.l.b16 %v41
    %v301 = vunpack.c.h.b16 %v41
    %v302 = vunpack.c.l.b16 %v42
    %v303 = vunpack.c.h.b16 %v42
    %v304 = vunpack.c.l.b16 %v43
    %v305 = vunpack.c.h.b16 %v43
    %v306 = vunpack.c.l.b16 %v44
    %v307 = vunpack.c.h.b16 %v44
    %v308 = vunpack.c.l.b16 %v45
    %v309 = vunpack.c.h.b16 %v45
    %v310 = vunpack.c.l.b16 %v46
    %v311 = vunpack.c.h.b16 %v46
    %v312 = vunpack.c.l.b16 %v47
    %v313 = vunpack.c.h.b16 %v47
    %v314 = vunpack.c.l.b16 %v48
    %v315 = vunpack.c.h.b16 %v48
    %v316 = vunpack.c.l.b16 %v49
    %v317 = vunpack.c.h.b16 %v49
    %v318 = vunpack.c.l.b16 %v50
    %v319 = vunpack.c.h.b16 %v50
    %v320 = vunpack.c.l.b16 %v51
    %v321 = vunpack.c.h.b16 %v51
    %v322 = vunpack.c.l.b16 %v52
    %v323 = vunpack.c.h.b16 %v52
    %v324 = vunpack.c.l.b16 %v53
    %v325 = vunpack.c.h.b16 %v53
    %v326 = vunpack.c.l.b16 %v54
    %v327 = vunpack.c.h.b16 %v54
    %v328 = vunpack.c.l.b16 %v55
    %v329 = vunpack.c.h.b16 %v55
    %v330 = vunpack.c.l.b16 %v56
    %v331 = vunpack.c.h.b16 %v56
    %v332 = vunpack.c.l.b16 %v57
    %v333 = vunpack.c.h.b16 %v57
    %v334 = vunpack.c.l.b16 %v58
    %v335 = vunpack.c.h.b16 %v58
    %v336 = vunpack.c.l.b16 %v59
    %v337 = vunpack.c.h.b16 %v59
    %v338 = vunpack.c.l.b16 %v60
    %v339 = vunpack.c.h.b16 %v60
    %v340 = vunpack.c.l.b16 %v61
    %v341 = vunpack.c.h.b16 %v61
    %v342 = vunpack.c.l.b16 %v62
    %v343 = vunpack.c.h.b16 %v62
    %v344 = vunpack.c.l.b16 %v63
    %v345 = vunpack.c.h.b16 %v63
    %v346 = vunpack.c.l.b16 %v64
    %v347 = vunpack.c.h.b16 %v64
    %v348 = vunpack.c.l.b16 %v65
    %v349 = vunpack.c.h.b16 %v65
    %v350 = vunpack.c.l.b16 %v66
    %v351 = vunpack.c.h.b16 %v66
    %v352 = vunpack.c.l.b16 %v67
    %v353 = vunpack.c.h.b16 %v67
    %v354 = vunpack.c.l.b16 %v68
    %v355 = vunpack.c.h.b16 %v68
    %v356 = vunpack.c.l.b16 %v69
    %v357 = vunpack.c.h.b16 %v69
    %v358 = vunpack.c.l.b16 %v70
    %v359 = vunpack.c.h.b16 %v70
    %v360 = vunpack.c.l.b16 %v71
    %v361 = vunpack.c.h.b16 %v71
    %v362 = vunpack.c.l.b16 %v72
    %v363 = vunpack.c.h.b16 %v72
    %v364 = vunpack.c.l.b16 %v73
    %v365 = vunpack.c.h.b16 %v73
    %v366 = vunpack.c.l.b16 %v74
    %v367 = vunpack.c.h.b16 %v74
    %v368 = vunpack.c.l.b16 %v75
    %v369 = vunpack.c.h.b16 %v75
    %v370 = vunpack.c.l.b16 %v76
    %v371 = vunpack.c.h.b16 %v76
    %v372 = vunpack.c.l.b16 %v77
    %v373 = vunpack.c.h.b16 %v77
    %v374 = vunpack.c.l.b16 %v78
    %v375 = vunpack.c.h.b16 %v78
    %v376 = vunpack.c.l.b16 %v79
    %v377 = vunpack.c.h.b16 %v79
    %v378 = vunpack.c.l.b16 %v80
    %v379 = vunpack.c.h.b16 %v80
    %v380 = vunpack.c.l.b16 %v81
    %v381 = vunpack.c.h.b16 %v81
    %v382 = vunpack.c.l.b16 %v82
    %v383 = vunpack.c.h.b16 %v82
    %v384 = vunpack.c.l.b16 %v83
    %v385 = vunpack.c.h.b16 %v83
    %v386 = vunpack.c.l.b16 %v84
    %v387 = vunpack.c.h.b16 %v84
    %v388 = vunpack.c.l.b16 %v85
    %v389 = vunpack.c.h.b16 %v85
    %v390 = vunpack.c.l.b16 %v86
    %v391 = vunpack.c.h.b16 %v86
    %v392 = vunpack.c.l.b16 %v87
    %v393 = vunpack.c.h.b16 %v87
    %v394 = vunpack.c.l.b16 %v88
    %v395 = vunpack.c.h.b16 %v88
    %v396 = vunpack.c.l.b16 %v89
    %v397 = vunpack.c.h.b16 %v89
    %v398 = vunpack.c.l.b16 %v90
    %v399 = vunpack.c.h.b16 %v90
    %v400 = vunpack.c.l.b16 %v91
    %v401 = vunpack.c.h.b16 %v91
    %v402 = vunpack.c.l.b16 %v92
    %v403 = vunpack.c.h.b16 %v92
    %v404 = vunpack.c.l.b16 %v93
    %v405 = vunpack.c.h.b16 %v93
    %v406 = vunpack.c.l.b16 %v94
    %v407 = vunpack.c.h.b16 %v94
    %v408 = vunpack.c.l.b16 %v95
    %v409 = vunpack.c.h.b16 %v95
    %v410 = vunpack.c.l.b16 %v96
    %v411 = vunpack.c.h.b16 %v96
    %v412 = vunpack.c.l.b16 %v97
    %v413 = vunpack.c.h.b16 %v97
    %v414 = vunpack.c.l.b16 %v98
    %v415 = vunpack.c.h.b16 %v98
    %v416 = vunpack.c.l.b16 %v99
    %v417 = vunpack.c.h.b16 %v99
    %v418 = vunpack.c.l.b16 %v100
    %v419 = vunpack.c.h.b16 %v100
    %v420 = vunpack.c.l.b16 %v101
    %v421 = vunpack.c.h.b16 %v101
    %v422 = vunpack.c.l.b16 %v102
    %v423 = vunpack.c.h.b16 %v102
    %v424 = vunpack.c.l.b16 %v103
    %v425 = vunpack.c.h.b16 %v103
    %v426 = vunpack.c.l.b16 %v104
    %v427 = vunpack.c.h.b16 %v104
    %v428 = vunpack.c.l.b16 %v105
    %v429 = vunpack.c.h.b16 %v105
    %v430 = vunpack.c.l.b16 %v106
    %v431 = vunpack.c.h.b16 %v106
    %v432 = vunpack.c.l.b16 %v107
    %v433 = vunpack.c.h.b16 %v107
    %v434 = vunpack.c.l.b16 %v108
    %v435 = vunpack.c.h.b16 %v108
    %v436 = vunpack.c.l.b16 %v109
    %v437 = vunpack.c.h.b16 %v109
    %v438 = vunpack.c.l.b16 %v110
    %v439 = vunpack.c.h.b16 %v110
    %v440 = vunpack.c.l.b16 %v111
    %v441 = vunpack.c.h.b16 %v111
    %v442 = vunpack.c.l.b16 %v112
    %v443 = vunpack.c.h.b16 %v112
    %v444 = vunpack.c.l.b16 %v113
    %v445 = vunpack.c.h.b16 %v113
    %v446 = vunpack.c.l.b16 %v114
    %v447 = vunpack.c.h.b16 %v114
    %v448 = vunpack.c.l.b16 %v115
    %v449 = vunpack.c.h.b16 %v115
    %v450 = vunpack.c.l.b16 %v116
    %v451 = vunpack.c.h.b16 %v116
    %v452 = vunpack.c.l.b16 %v117
    %v453 = vunpack.c.h.b16 %v117
    %v454 = vunpack.c.l.b16 %v118
    %v455 = vunpack.c.h.b16 %v118
    %v456 = vunpack.c.l.b16 %v119
    %v457 = vunpack.c.h.b16 %v119
    %v458 = vunpack.c.l.b16 %v120
    %v459 = vunpack.c.h.b16 %v120
    %v460 = vunpack.c.l.b16 %v121
    %v461 = vunpack.c.h.b16 %v121
    %v462 = vunpack.c.l.b16 %v122
    %v463 = vunpack.c.h.b16 %v122
    %v464 = vunpack.c.l.b16 %v123
    %v465 = vunpack.c.h.b16 %v123
    %v466 = vunpack.c.l.b16 %v124
    %v467 = vunpack.c.h.b16 %v124
    %v468 = vunpack.c.l.b16 %v125
    %v469 = vunpack.c.h.b16 %v125
    %v470 = vunpack.c.l.b16 %v126
    %v471 = vunpack.c.h.b16 %v126
    %v472 = vunpack.c.l.b16 %v127
    %v473 = vunpack.c.h.b16 %v127
    %v474 = vunpack.c.l.b16 %v128
    %v475 = vunpack.c.h.b16 %v128
    %v476 = vunpack.c.l.b16 %v129
    %v477 = vunpack.c.h.b16 %v129
    %v478 = vunpack.c.l.b16 %v130
    %v479 = vunpack.c.h.b16 %v130
    %v480 = vunpack.c.l.b16 %v131
    %v481 = vunpack.c.h.b16 %v131
    %v482 = vunpack.c.l.b16 %v132
    %v483 = vunpack.c.h.b16 %v132
    %v484 = vunpack.c.l.b16 %v133
    %v485 = vunpack.c.h.b16 %v133
    %v486 = vunpack.c.l.b16 %v134
    %v487 = vunpack.c.h.b16 %v134
    %v488 = vunpack.c.l.b16 %v135
    %v489 = vunpack.c.h.b16 %v135
    %v490 = vunpack.c.l.b16 %v136
    %v491 = vunpack.c.h.b16 %v136
    %v492 = vunpack.c.l.b16 %v137
    %v493 = vunpack.c.h.b16 %v137
    %v494 = vunpack.c.l.b16 %v138
    %v495 = vunpack.c.h.b16 %v138
    %v496 = vunpack.c.l.b16 %v139
    %v497 = vunpack.c.h.b16 %v139
    %v498 = vunpack.c.l.b16 %v140
    %v499 = vunpack.c.h.b16 %v140
    %v500 = vunpack.c.l.b16 %v141
    %v501 = vunpack.c.h.b16 %v141
    %v502 = vunpack.c.l.b16 %v142
    %v503 = vunpack.c.h.b16 %v142
    %v504 = vunpack.c.l.b16 %v143
    %v505 = vunpack.c.h.b16 %v143
    %v506 = vunpack.c.l.b16 %v144
    %v507 = vunpack.c.h.b16 %v144
    %v508 = vunpack.c.l.b16 %v145
    %v509 = vunpack.c.h.b16 %v145
    %v510 = vunpack.c.l.b16 %v146
    %v511 = vunpack.c.h.b16 %v146
    %v512 = vunpack.c.l.b16 %v147
    %v513 = vunpack.c.h.b16 %v147
    %v514 = vunpack.c.l.b16 %v148
    %v515 = vunpack.c.h.b16 %v148
    %v516 = vunpack.c.l.b16 %v149
    %v517 = vunpack.c.h.b16 %v149
    %v518 = vunpack.c.l.b16 %v150
    %v519 = vunpack.c.h.b16 %v150
    %v520 = vunpack.c.l.b16 %v151
    %v521 = vunpack.c.h.b16 %v151
    %v522 = vunpack.c.l.b16 %v152
    %v523 = vunpack.c.h.b16 %v152
    %v524 = vunpack.c.l.b16 %v153
    %v525 = vunpack.c.h.b16 %v153
    %v526 = vunpack.c.l.b16 %v154
    %v527 = vunpack.c.h.b16 %v154
    %v528 = vunpack.c.l.b16 %v155
    %v529 = vunpack.c.h.b16 %v155
    %v530 = vunpack.c.l.b16 %v156
    %v531 = vunpack.c.h.b16 %v156
    %v532 = vunpack.c.l.b16 %v157
    %v533 = vunpack.c.h.b16 %v157
    %v534 = vunpack.c.l.b16 %v158
    %v535 = vunpack.c.h.b16 %v158
    %v536 = vunpack.c.l.b16 %v159
    %v537 = vunpack.c.h.b16 %v159
    %v538 = vunpack.c.l.b16 %v160
    %v539 = vunpack.c.h.b16 %v160
    %v540 = vunpack.c.l.b16 %v161
    %v541 = vunpack.c.h.b16 %v161
    %v542 = vunpack.c.l.b16 %v162
    %v543 = vunpack.c.h.b16 %v162
    %v544 = vunpack.c.l.b16 %v163
    %v545 = vunpack.c.h.b16 %v163
    %v546 = vunpack.c.l.b16 %v164
    %v547 = vunpack.c.h.b16 %v164
    %v548 = vunpack.c.l.b16 %v165
    %v549 = vunpack.c.h.b16 %v165
    %v550 = vpack.c.b16 %v298, %v294
    %v551 = vpack.c.b16 %v299, %v295
    %v552 = vpack.c.b16 %v300, %v296
    %v553 = vpack.c.b16 %v301, %v297
    %v554 = vpack.c.b16 %v306, %v302
    %v555 = vpack.c.b16 %v307, %v303
    %v556 = vpack.c.b16 %v308, %v304
    %v557 = vpack.c.b16 %v309, %v305
    %v558 = vpack.c.b16 %v314, %v310
    %v559 = vpack.c.b16 %v315, %v311
    %v560 = vpack.c.b16 %v316, %v312
    %v561 = vpack.c.b16 %v317, %v313
    %v562 = vpack.c.b16 %v322, %v318
    %v563 = vpack.c.b16 %v323, %v319
    %v564 = vpack.c.b16 %v324, %v320
    %v565 = vpack.c.b16 %v325, %v321
    %v566 = vpack.c.b16 %v330, %v326
    %v567 = vpack.c.b16 %v331, %v327
    %v568 = vpack.c.b16 %v332, %v328
    %v569 = vpack.c.b16 %v333, %v329
    %v570 = vpack.c.b16 %v338, %v334
    %v571 = vpack.c.b16 %v339, %v335
    %v572 = vpack.c.b16 %v340, %v336
    %v573 = vpack.c.b16 %v341, %v337
    %v574 = vpack.c.b16 %v346, %v342
    %v575 = vpack.c.b16 %v347, %v343
    %v576 = vpack.c.b16 %v348, %v344
    %v577 = vpack.c.b16 %v349, %v345
    %v578 = vpack.c.b16 %v354, %v350
    %v579 = vpack.c.b16 %v355, %v351
    %v580 = vpack.c.b16 %v356, %v352
    %v581 = vpack.c.b16 %v357, %v353
    %v582 = vpack.c.b16 %v362, %v358
    %v583 = vpack.c.b16 %v363, %v359
    %v584 = vpack.c.b16 %v364, %v360
    %v585 = vpack.c.b16 %v365, %v361
    %v586 = vpack.c.b16 %v370, %v366
    %v587 = vpack.c.b16 %v371, %v367
    %v588 = vpack.c.b16 %v372, %v368
    %v589 = vpack.c.b16 %v373, %v369
    %v590 = vpack.c.b16 %v378, %v374
    %v591 = vpack.c.b16 %v379, %v375
    %v592 = vpack.c.b16 %v380, %v376
    %v593 = vpack.c.b16 %v381, %v377
    %v594 = vpack.c.b16 %v386, %v382
    %v595 = vpack.c.b16 %v387, %v383
    %v596 = vpack.c.b16 %v388, %v384
    %v597 = vpack.c.b16 %v389, %v385
    %v598 = vpack.c.b16 %v394, %v390
    %v599 = vpack.c.b16 %v395, %v391
    %v600 = vpack.c.b16 %v396, %v392
    %v601 = vpack.c.b16 %v397, %v393
    %v602 = vpack.c.b16 %v402, %v398
    %v603 = vpack.c.b16 %v403, %v399
    %v604 = vpack.c.b16 %v404, %v400
    %v605 = vpack.c.b16 %v405, %v401
    %v606 = vpack.c.b16 %v410, %v406
    %v607 = vpack.c.b16 %v411, %v407
    %v608 = vpack.c.b16 %v412, %v408
    %v609 = vpack.c.b16 %v413, %v409
    %v610 = vpack.c.b16 %v418, %v414
    %v611 = vpack.c.b16 %v419, %v415
    %v612 = vpack.c.b16 %v420, %v416
    %v613 = vpack.c.b16 %v421, %v417
    %v614 = vpack.c.b16 %v426, %v422
    %v615 = vpack.c.b16 %v427, %v423
    %v616 = vpack.c.b16 %v428, %v424
    %v617 = vpack.c.b16 %v429, %v425
    %v618 = vpack.c.b16 %v434, %v430
    %v619 = vpack.c.b16 %v435, %v431
    %v620 = vpack.c.b16 %v436, %v432
    %v621 = vpack.c.b16 %v437, %v433
    %v622 = vpack.c.b16 %v442, %v438
    %v623 = vpack.c.b16 %v443, %v439
    %v624 = vpack.c.b16 %v444, %v440
    %v625 = vpack.c.b16 %v445, %v441
    %v626 = vpack.c.b16 %v450, %v446
    %v627 = vpack.c.b16 %v451, %v447
    %v628 = vpack.c.b16 %v452, %v448
    %v629 = vpack.c.b16 %v453, %v449
    %v630 = vpack.c.b16 %v458, %v454
    %v631 = vpack.c.b16 %v459, %v455
    %v632 = vpack.c.b16 %v460, %v456
    %v633 = vpack.c.b16 %v461, %v457
    %v634 = vpack.c.b16 %v466, %v462
    %v635 = vpack.c.b16 %v467, %v463
    %v636 = vpack.c.b16 %v468, %v464
    %v637 = vpack.c.b16 %v469, %v465
    %v638 = vpack.c.b16 %v474, %v470
    %v639 = vpack.c.b16 %v475, %v471
    %v640 = vpack.c.b16 %v476, %v472
    %v641 = vpack.c.b16 %v477, %v473
    %v642 = vpack.c.b16 %v482, %v478
    %v643 = vpack.c.b16 %v483, %v479
    %v644 = vpack.c.b16 %v484, %v480
    %v645 = vpack.c.b16 %v485, %v481
    %v646 = vpack.c.b16 %v490, %v486
    %v647 = vpack.c.b16 %v491, %v487
    %v648 = vpack.c.b16 %v492, %v488
    %v649 = vpack.c.b16 %v493, %v489
    %v650 = vpack.c.b16 %v498, %v494
    %v651 = vpack.c.b16 %v499, %v495
    %v652 = vpack.c.b16 %v500, %v496
    %v653 = vpack.c.b16 %v501, %v497
    %v654 = vpack.c.b16 %v506, %v502
    %v655 = vpack.c.b16 %v507, %v503
    %v656 = vpack.c.b16 %v508, %v504
    %v657 = vpack.c.b16 %v509, %v505
    %v658 = vpack.c.b16 %v514, %v510
    %v659 = vpack.c.b16 %v515, %v511
    %v660 = vpack.c.b16 %v516, %v512
    %v661 = vpack.c.b16 %v517, %v513
    %v662 = vpack.c.b16 %v522, %v518
    %v663 = vpack.c.b16 %v523, %v519
    %v664 = vpack.c.b16 %v524, %v520
    %v665 = vpack.c.b16 %v525, %v521
    %v666 = vpack.c.b16 %v530, %v526
    %v667 = vpack.c.b16 %v531, %v527
    %v668 = vpack.c.b16 %v532, %v528
    %v669 = vpack.c.b16 %v533, %v529
    %v670 = vpack.c.b16 %v538, %v534
    %v671 = vpack.c.b16 %v539, %v535
    %v672 = vpack.c.b16 %v540, %v536
    %v673 = vpack.c.b16 %v541, %v537
    %v674 = vpack.c.b16 %v546, %v542
    %v675 = vpack.c.b16 %v547, %v543
    %v676 = vpack.c.b16 %v548, %v544
    %v677 = vpack.c.b16 %v549, %v545
    %806 = vmatprep.subr.bf16.mxu0 %v551
    %807 = vmatpush1.bf16.msra.mxu0 %v550
    %808 = vmatprep.subr.bf16.mxu0 %v555
    %809 = vmatpush1.bf16.msra.mxu0 %v554
    %810 = vmatprep.subr.bf16.mxu0 %v559
    %811 = vmatpush1.bf16.msra.mxu0 %v558
    %812 = vmatprep.subr.bf16.mxu0 %v563
    %813 = vmatpush1.bf16.msra.mxu0 %v562
    %814 = vmatprep.subr.bf16.mxu0 %v567
    %815 = vmatpush1.bf16.msra.mxu0 %v566
    %816 = vmatprep.subr.bf16.mxu0 %v571
    %817 = vmatpush1.bf16.msra.mxu0 %v570
    %818 = vmatprep.subr.bf16.mxu0 %v575
    %819 = vmatpush1.bf16.msra.mxu0 %v574
    %820 = vmatprep.subr.bf16.mxu0 %v579
    %821 = vmatpush1.bf16.msra.mxu0 %v578
    %822 = vmatprep.subr.bf16.mxu0 %v583
    %823 = vmatpush1.bf16.msra.mxu0 %v582
    %824 = vmatprep.subr.bf16.mxu0 %v587
    %825 = vmatpush1.bf16.msra.mxu0 %v586
    %826 = vmatprep.subr.bf16.mxu0 %v591
    %827 = vmatpush1.bf16.msra.mxu0 %v590
    %828 = vmatprep.subr.bf16.mxu0 %v595
    %829 = vmatpush1.bf16.msra.mxu0 %v594
    %830 = vmatprep.subr.bf16.mxu0 %v599
    %831 = vmatpush1.bf16.msra.mxu0 %v598
    %832 = vmatprep.subr.bf16.mxu0 %v603
    %833 = vmatpush1.bf16.msra.mxu0 %v602
    %834 = vmatprep.subr.bf16.mxu0 %v607
    %835 = vmatpush1.bf16.msra.mxu0 %v606
    %836 = vmatprep.subr.bf16.mxu0 %v611
    %837 = vmatpush1.bf16.msra.mxu0 %v610
    %838 = vmatprep.mubr.bf16.mxu0 %v35
    %839 = vmatmul.mubr.bf16.gmra.mrb[0].mxu0 %v34
    %v840 = vpop.f32.mrb[0].mxu0
    %v841 = vadd.f32 0.0, %v840
    %v842 = vpop.f32.mrb[0].mxu0
    %v843 = vadd.f32 0.0, %v842
    %v844 = vpop.f32.mrb[0].mxu0
    %v845 = vpop.f32.mrb[0].mxu0
    %846 = vdwg.mxu0
    %847 = vmatprep.subr.bf16.mxu0 %v615
    %848 = vmatpush1.bf16.msra.mxu0 %v614
    %849 = vmatprep.subr.bf16.mxu0 %v619
    %850 = vmatpush1.bf16.msra.mxu0 %v618
    %851 = vmatprep.subr.bf16.mxu0 %v623
    %852 = vmatpush1.bf16.msra.mxu0 %v622
    %853 = vmatprep.subr.bf16.mxu0 %v627
    %854 = vmatpush1.bf16.msra.mxu0 %v626
    %855 = vmatprep.subr.bf16.mxu0 %v631
    %856 = vmatpush1.bf16.msra.mxu0 %v630
    %857 = vmatprep.subr.bf16.mxu0 %v635
    %858 = vmatpush1.bf16.msra.mxu0 %v634
    %859 = vmatprep.subr.bf16.mxu0 %v639
    %860 = vmatpush1.bf16.msra.mxu0 %v638
    %861 = vmatprep.subr.bf16.mxu0 %v643
    %862 = vmatpush1.bf16.msra.mxu0 %v642
    %863 = vmatprep.subr.bf16.mxu0 %v647
    %864 = vmatpush1.bf16.msra.mxu0 %v646
    %865 = vmatprep.subr.bf16.mxu0 %v651
    %866 = vmatpush1.bf16.msra.mxu0 %v650
    %867 = vmatprep.subr.bf16.mxu0 %v655
    %868 = vmatpush1.bf16.msra.mxu0 %v654
    %869 = vmatprep.subr.bf16.mxu0 %v659
    %870 = vmatpush1.bf16.msra.mxu0 %v658
    %871 = vmatprep.subr.bf16.mxu0 %v663
    %872 = vmatpush1.bf16.msra.mxu0 %v662
    %873 = vmatprep.subr.bf16.mxu0 %v667
    %874 = vmatpush1.bf16.msra.mxu0 %v666
    %875 = vmatprep.subr.bf16.mxu0 %v671
    %876 = vmatpush1.bf16.msra.mxu0 %v670
    %877 = vmatprep.subr.bf16.mxu0 %v675
    %878 = vmatpush1.bf16.msra.mxu0 %v674
    %879 = vmatprep.mubr.bf16.mxu0 %v37
    %880 = vmatmul.mubr.bf16.gmra.mrb[0].mxu0 %v36
    %v881 = vpop.f32.mrb[0].mxu0
    %v882 = vadd.f32 %v841, %v881
    %v883 = vpop.f32.mrb[0].mxu0
    %v884 = vadd.f32 %v843, %v883
    %v885 = vpop.f32.mrb[0].mxu0
    %v886 = vpop.f32.mrb[0].mxu0
    %887 = vdwg.mxu0
    %888 = vmatprep.subr.bf16.mxu0 %v553
    %889 = vmatpush1.bf16.msra.mxu0 %v552
    %890 = vmatprep.subr.bf16.mxu0 %v557
    %891 = vmatpush1.bf16.msra.mxu0 %v556
    %892 = vmatprep.subr.bf16.mxu0 %v561
    %893 = vmatpush1.bf16.msra.mxu0 %v560
    %894 = vmatprep.subr.bf16.mxu0 %v565
    %895 = vmatpush1.bf16.msra.mxu0 %v564
    %896 = vmatprep.subr.bf16.mxu0 %v569
    %897 = vmatpush1.bf16.msra.mxu0 %v568
    %898 = vmatprep.subr.bf16.mxu0 %v573
    %899 = vmatpush1.bf16.msra.mxu0 %v572
    %900 = vmatprep.subr.bf16.mxu0 %v577
    %901 = vmatpush1.bf16.msra.mxu0 %v576
    %902 = vmatprep.subr.bf16.mxu0 %v581
    %903 = vmatpush1.bf16.msra.mxu0 %v580
    %904 = vmatprep.subr.bf16.mxu0 %v585
    %905 = vmatpush1.bf16.msra.mxu0 %v584
    %906 = vmatprep.subr.bf16.mxu0 %v589
    %907 = vmatpush1.bf16.msra.mxu0 %v588
    %908 = vmatprep.subr.bf16.mxu0 %v593
    %909 = vmatpush1.bf16.msra.mxu0 %v592
    %910 = vmatprep.subr.bf16.mxu0 %v597
    %911 = vmatpush1.bf16.msra.mxu0 %v596
    %912 = vmatprep.subr.bf16.mxu0 %v601
    %913 = vmatpush1.bf16.msra.mxu0 %v600
    %914 = vmatprep.subr.bf16.mxu0 %v605
    %915 = vmatpush1.bf16.msra.mxu0 %v604
    %916 = vmatprep.subr.bf16.mxu0 %v609
    %917 = vmatpush1.bf16.msra.mxu0 %v608
    %918 = vmatprep.subr.bf16.mxu0 %v613
    %919 = vmatpush1.bf16.msra.mxu0 %v612
    %920 = vmatprep.mubr.bf16.mxu0 %v35
    %921 = vmatmul.mubr.bf16.gmra.mrb[0].mxu0 %v34
    %v922 = vpop.f32.mrb[0].mxu0
    %v923 = vadd.f32 0.0, %v922
    %v924 = vpop.f32.mrb[0].mxu0
    %v925 = vadd.f32 0.0, %v924
    %v926 = vpop.f32.mrb[0].mxu0
    %v927 = vpop.f32.mrb[0].mxu0
    %928 = vdwg.mxu0
    %929 = vmatprep.subr.bf16.mxu0 %v617
    %930 = vmatpush1.bf16.msra.mxu0 %v616
    %931 = vmatprep.subr.bf16.mxu0 %v621
    %932 = vmatpush1.bf16.msra.mxu0 %v620
    %933 = vmatprep.subr.bf16.mxu0 %v625
    %934 = vmatpush1.bf16.msra.mxu0 %v624
    %935 = vmatprep.subr.bf16.mxu0 %v629
    %936 = vmatpush1.bf16.msra.mxu0 %v628
    %937 = vmatprep.subr.bf16.mxu0 %v633
    %938 = vmatpush1.bf16.msra.mxu0 %v632
    %939 = vmatprep.subr.bf16.mxu0 %v637
    %940 = vmatpush1.bf16.msra.mxu0 %v636
    %941 = vmatprep.subr.bf16.mxu0 %v641
    %942 = vmatpush1.bf16.msra.mxu0 %v640
    %943 = vmatprep.subr.bf16.mxu0 %v645
    %944 = vmatpush1.bf16.msra.mxu0 %v644
    %945 = vmatprep.subr.bf16.mxu0 %v649
    %946 = vmatpush1.bf16.msra.mxu0 %v648
    %947 = vmatprep.subr.bf16.mxu0 %v653
    %948 = vmatpush1.bf16.msra.mxu0 %v652
    %949 = vmatprep.subr.bf16.mxu0 %v657
    %950 = vmatpush1.bf16.msra.mxu0 %v656
    %951 = vmatprep.subr.bf16.mxu0 %v661
    %952 = vmatpush1.bf16.msra.mxu0 %v660
    %953 = vmatprep.subr.bf16.mxu0 %v665
    %954 = vmatpush1.bf16.msra.mxu0 %v664
    %955 = vmatprep.subr.bf16.mxu0 %v669
    %956 = vmatpush1.bf16.msra.mxu0 %v668
    %957 = vmatprep.subr.bf16.mxu0 %v673
    %958 = vmatpush1.bf16.msra.mxu0 %v672
    %959 = vmatprep.subr.bf16.mxu0 %v677
    %960 = vmatpush1.bf16.msra.mxu0 %v676
    %961 = vmatprep.mubr.bf16.mxu0 %v37
    %962 = vmatmul.mubr.bf16.gmra.mrb[0].mxu0 %v36
    %v963 = vpop.f32.mrb[0].mxu0
    %v964 = vadd.f32 %v923, %v963
    %v965 = vpop.f32.mrb[0].mxu0
    %v966 = vadd.f32 %v925, %v965
    %v967 = vpop.f32.mrb[0].mxu0
    %v968 = vpop.f32.mrb[0].mxu0
    %969 = vdwg.mxu0
    %v970 = vxor.u32 %v882, 2147483648
    %v971 = vxor.u32 %v884, 2147483648
    %v972 = vxor.u32 %v964, 2147483648
    %v973 = vxor.u32 %v966, 2147483648
    %v974 = vmul.f32 %v970, 1.442695
    %v975 = vpow.pop %v974
    %v976 = vmul.f32 %v971, 1.442695
    %v977 = vpow.pop %v976
    %v978 = vmul.f32 %v972, 1.442695
    %v979 = vpow.pop %v978
    %v980 = vmul.f32 %v973, 1.442695
    %v981 = vpow.pop %v980
    %v982 = vadd.f32 %v975, 1.0
    %v983 = vadd.f32 %v977, 1.0
    %v984 = vadd.f32 %v979, 1.0
    %v985 = vadd.f32 %v981, 1.0
    %v986 = vrcp.pop %v982
    %v987 = vmul.f32 1.0, %v986
    %v988 = vrcp.pop %v983
    %v989 = vmul.f32 1.0, %v988
    %v990 = vrcp.pop %v984
    %v991 = vmul.f32 1.0, %v990
    %v992 = vrcp.pop %v985
    %v993 = vmul.f32 1.0, %v992
    %v994 = vpack.c.bf16 %v987, %v987
    %v995 = vpack.c.bf16 %v989, %v989
    %v996 = vpack.c.bf16 %v991, %v991
    %v997 = vpack.c.bf16 %v993, %v993
    %v998 = vld [vmem:[%s2] sm:$0xf]
    %v999 = vld [vmem:[%s2 + $0x4] sm:$0xf]
    %v1000 = vld [vmem:[%s2 + $0x8] sm:$0xf]
    %v1001 = vld [vmem:[%s2 + $0xc] sm:$0xf]
    %v1002 = vld [vmem:[%s2 + $0x10] sm:$0xf]
    %v1003 = vld [vmem:[%s2 + $0x14] sm:$0xf]
    %v1004 = vld [vmem:[%s2 + $0x18] sm:$0xf]
    %v1005 = vld [vmem:[%s2 + $0x1c] sm:$0xf]
    %v1006 = vld [vmem:[%s2 + $0x20] sm:$0xf]
    %v1007 = vld [vmem:[%s2 + $0x24] sm:$0xf]
    %v1008 = vld [vmem:[%s2 + $0x28] sm:$0xf]
    %v1009 = vld [vmem:[%s2 + $0x2c] sm:$0xf]
    %v1010 = vld [vmem:[%s2 + $0x30] sm:$0xf]
    %v1011 = vld [vmem:[%s2 + $0x34] sm:$0xf]
    %v1012 = vld [vmem:[%s2 + $0x38] sm:$0xf]
    %v1013 = vld [vmem:[%s2 + $0x3c] sm:$0xf]
    %v1014 = vld [vmem:[%s2 + $0x40] sm:$0xf]
    %v1015 = vld [vmem:[%s2 + $0x44] sm:$0xf]
    %v1016 = vld [vmem:[%s2 + $0x48] sm:$0xf]
    %v1017 = vld [vmem:[%s2 + $0x4c] sm:$0xf]
    %v1018 = vld [vmem:[%s2 + $0x50] sm:$0xf]
    %v1019 = vld [vmem:[%s2 + $0x54] sm:$0xf]
    %v1020 = vld [vmem:[%s2 + $0x58] sm:$0xf]
    %v1021 = vld [vmem:[%s2 + $0x5c] sm:$0xf]
    %v1022 = vld [vmem:[%s2 + $0x60] sm:$0xf]
    %v1023 = vld [vmem:[%s2 + $0x64] sm:$0xf]
    %v1024 = vld [vmem:[%s2 + $0x68] sm:$0xf]
    %v1025 = vld [vmem:[%s2 + $0x6c] sm:$0xf]
    %v1026 = vld [vmem:[%s2 + $0x70] sm:$0xf]
    %v1027 = vld [vmem:[%s2 + $0x74] sm:$0xf]
    %v1028 = vld [vmem:[%s2 + $0x78] sm:$0xf]
    %v1029 = vld [vmem:[%s2 + $0x7c] sm:$0xf]
    %v1030 = vld [vmem:[%s2 + $0x80] sm:$0xf]
    %v1031 = vld [vmem:[%s2 + $0x84] sm:$0xf]
    %v1032 = vld [vmem:[%s2 + $0x88] sm:$0xf]
    %v1033 = vld [vmem:[%s2 + $0x8c] sm:$0xf]
    %v1034 = vld [vmem:[%s2 + $0x90] sm:$0xf]
    %v1035 = vld [vmem:[%s2 + $0x94] sm:$0xf]
    %v1036 = vld [vmem:[%s2 + $0x98] sm:$0xf]
    %v1037 = vld [vmem:[%s2 + $0x9c] sm:$0xf]
    %v1038 = vld [vmem:[%s2 + $0xa0] sm:$0xf]
    %v1039 = vld [vmem:[%s2 + $0xa4] sm:$0xf]
    %v1040 = vld [vmem:[%s2 + $0xa8] sm:$0xf]
    %v1041 = vld [vmem:[%s2 + $0xac] sm:$0xf]
    %v1042 = vld [vmem:[%s2 + $0xb0] sm:$0xf]
    %v1043 = vld [vmem:[%s2 + $0xb4] sm:$0xf]
    %v1044 = vld [vmem:[%s2 + $0xb8] sm:$0xf]
    %v1045 = vld [vmem:[%s2 + $0xbc] sm:$0xf]
    %v1046 = vld [vmem:[%s2 + $0xc0] sm:$0xf]
    %v1047 = vld [vmem:[%s2 + $0xc4] sm:$0xf]
    %v1048 = vld [vmem:[%s2 + $0xc8] sm:$0xf]
    %v1049 = vld [vmem:[%s2 + $0xcc] sm:$0xf]
    %v1050 = vld [vmem:[%s2 + $0xd0] sm:$0xf]
    %v1051 = vld [vmem:[%s2 + $0xd4] sm:$0xf]
    %v1052 = vld [vmem:[%s2 + $0xd8] sm:$0xf]
    %v1053 = vld [vmem:[%s2 + $0xdc] sm:$0xf]
    %v1054 = vld [vmem:[%s2 + $0xe0] sm:$0xf]
    %v1055 = vld [vmem:[%s2 + $0xe4] sm:$0xf]
    %v1056 = vld [vmem:[%s2 + $0xe8] sm:$0xf]
    %v1057 = vld [vmem:[%s2 + $0xec] sm:$0xf]
    %v1058 = vld [vmem:[%s2 + $0xf0] sm:$0xf]
    %v1059 = vld [vmem:[%s2 + $0xf4] sm:$0xf]
    %v1060 = vld [vmem:[%s2 + $0xf8] sm:$0xf]
    %v1061 = vld [vmem:[%s2 + $0xfc] sm:$0xf]
    %v1126 = vunpack.c.l.b16 %v998
    %v1127 = vunpack.c.l.b16 %v999
    %v1128 = vunpack.c.l.b16 %v1000
    %v1129 = vunpack.c.l.b16 %v1001
    %v1130 = vunpack.c.l.b16 %v1002
    %v1131 = vunpack.c.l.b16 %v1003
    %v1132 = vunpack.c.l.b16 %v1004
    %v1133 = vunpack.c.l.b16 %v1005
    %v1134 = vunpack.c.l.b16 %v1006
    %v1135 = vunpack.c.l.b16 %v1007
    %v1136 = vunpack.c.l.b16 %v1008
    %v1137 = vunpack.c.l.b16 %v1009
    %v1138 = vunpack.c.l.b16 %v1010
    %v1139 = vunpack.c.l.b16 %v1011
    %v1140 = vunpack.c.l.b16 %v1012
    %v1141 = vunpack.c.l.b16 %v1013
    %v1142 = vunpack.c.l.b16 %v1014
    %v1143 = vunpack.c.l.b16 %v1015
    %v1144 = vunpack.c.l.b16 %v1016
    %v1145 = vunpack.c.l.b16 %v1017
    %v1146 = vunpack.c.l.b16 %v1018
    %v1147 = vunpack.c.l.b16 %v1019
    %v1148 = vunpack.c.l.b16 %v1020
    %v1149 = vunpack.c.l.b16 %v1021
    %v1150 = vunpack.c.l.b16 %v1022
    %v1151 = vunpack.c.l.b16 %v1023
    %v1152 = vunpack.c.l.b16 %v1024
    %v1153 = vunpack.c.l.b16 %v1025
    %v1154 = vunpack.c.l.b16 %v1026
    %v1155 = vunpack.c.l.b16 %v1027
    %v1156 = vunpack.c.l.b16 %v1028
    %v1157 = vunpack.c.l.b16 %v1029
    %v1158 = vunpack.c.l.b16 %v1030
    %v1159 = vunpack.c.l.b16 %v1031
    %v1160 = vunpack.c.l.b16 %v1032
    %v1161 = vunpack.c.l.b16 %v1033
    %v1162 = vunpack.c.l.b16 %v1034
    %v1163 = vunpack.c.l.b16 %v1035
    %v1164 = vunpack.c.l.b16 %v1036
    %v1165 = vunpack.c.l.b16 %v1037
    %v1166 = vunpack.c.l.b16 %v1038
    %v1167 = vunpack.c.l.b16 %v1039
    %v1168 = vunpack.c.l.b16 %v1040
    %v1169 = vunpack.c.l.b16 %v1041
    %v1170 = vunpack.c.l.b16 %v1042
    %v1171 = vunpack.c.l.b16 %v1043
    %v1172 = vunpack.c.l.b16 %v1044
    %v1173 = vunpack.c.l.b16 %v1045
    %v1174 = vunpack.c.l.b16 %v1046
    %v1175 = vunpack.c.l.b16 %v1047
    %v1176 = vunpack.c.l.b16 %v1048
    %v1177 = vunpack.c.l.b16 %v1049
    %v1178 = vunpack.c.l.b16 %v1050
    %v1179 = vunpack.c.l.b16 %v1051
    %v1180 = vunpack.c.l.b16 %v1052
    %v1181 = vunpack.c.l.b16 %v1053
    %v1182 = vunpack.c.l.b16 %v1054
    %v1183 = vunpack.c.l.b16 %v1055
    %v1184 = vunpack.c.l.b16 %v1056
    %v1185 = vunpack.c.l.b16 %v1057
    %v1186 = vunpack.c.l.b16 %v1058
    %v1187 = vunpack.c.l.b16 %v1059
    %v1188 = vunpack.c.l.b16 %v1060
    %v1189 = vunpack.c.l.b16 %v1061
    %v1190 = vpack.c.b16 %v1127, %v1126
    %v1191 = vpack.c.b16 %v1129, %v1128
    %v1192 = vpack.c.b16 %v1131, %v1130
    %v1193 = vpack.c.b16 %v1133, %v1132
    %v1194 = vpack.c.b16 %v1135, %v1134
    %v1195 = vpack.c.b16 %v1137, %v1136
    %v1196 = vpack.c.b16 %v1139, %v1138
    %v1197 = vpack.c.b16 %v1141, %v1140
    %v1198 = vpack.c.b16 %v1143, %v1142
    %v1199 = vpack.c.b16 %v1145, %v1144
    %v1200 = vpack.c.b16 %v1147, %v1146
    %v1201 = vpack.c.b16 %v1149, %v1148
    %v1202 = vpack.c.b16 %v1151, %v1150
    %v1203 = vpack.c.b16 %v1153, %v1152
    %v1204 = vpack.c.b16 %v1155, %v1154
    %v1205 = vpack.c.b16 %v1157, %v1156
    %v1206 = vpack.c.b16 %v1159, %v1158
    %v1207 = vpack.c.b16 %v1161, %v1160
    %v1208 = vpack.c.b16 %v1163, %v1162
    %v1209 = vpack.c.b16 %v1165, %v1164
    %v1210 = vpack.c.b16 %v1167, %v1166
    %v1211 = vpack.c.b16 %v1169, %v1168
    %v1212 = vpack.c.b16 %v1171, %v1170
    %v1213 = vpack.c.b16 %v1173, %v1172
    %v1214 = vpack.c.b16 %v1175, %v1174
    %v1215 = vpack.c.b16 %v1177, %v1176
    %v1216 = vpack.c.b16 %v1179, %v1178
    %v1217 = vpack.c.b16 %v1181, %v1180
    %v1218 = vpack.c.b16 %v1183, %v1182
    %v1219 = vpack.c.b16 %v1185, %v1184
    %v1220 = vpack.c.b16 %v1187, %v1186
    %v1221 = vpack.c.b16 %v1189, %v1188
    %1254 = vmatprep.subr.bf16.mxu0 0
    %1255 = vmatpush1.bf16.msra.mxu0 %v1190
    %1256 = vmatprep.subr.bf16.mxu0 0
    %1257 = vmatpush1.bf16.msra.mxu0 %v1191
    %1258 = vmatprep.subr.bf16.mxu0 0
    %1259 = vmatpush1.bf16.msra.mxu0 %v1192
    %1260 = vmatprep.subr.bf16.mxu0 0
    %1261 = vmatpush1.bf16.msra.mxu0 %v1193
    %1262 = vmatprep.subr.bf16.mxu0 0
    %1263 = vmatpush1.bf16.msra.mxu0 %v1194
    %1264 = vmatprep.subr.bf16.mxu0 0
    %1265 = vmatpush1.bf16.msra.mxu0 %v1195
    %1266 = vmatprep.subr.bf16.mxu0 0
    %1267 = vmatpush1.bf16.msra.mxu0 %v1196
    %1268 = vmatprep.subr.bf16.mxu0 0
    %1269 = vmatpush1.bf16.msra.mxu0 %v1197
    %1270 = vmatprep.subr.bf16.mxu0 0
    %1271 = vmatpush1.bf16.msra.mxu0 %v1198
    %1272 = vmatprep.subr.bf16.mxu0 0
    %1273 = vmatpush1.bf16.msra.mxu0 %v1199
    %1274 = vmatprep.subr.bf16.mxu0 0
    %1275 = vmatpush1.bf16.msra.mxu0 %v1200
    %1276 = vmatprep.subr.bf16.mxu0 0
    %1277 = vmatpush1.bf16.msra.mxu0 %v1201
    %1278 = vmatprep.subr.bf16.mxu0 0
    %1279 = vmatpush1.bf16.msra.mxu0 %v1202
    %1280 = vmatprep.subr.bf16.mxu0 0
    %1281 = vmatpush1.bf16.msra.mxu0 %v1203
    %1282 = vmatprep.subr.bf16.mxu0 0
    %1283 = vmatpush1.bf16.msra.mxu0 %v1204
    %1284 = vmatprep.subr.bf16.mxu0 0
    %1285 = vmatpush1.bf16.msra.mxu0 %v1205
    %1286 = vmatprep.mubr.bf16.mxu0 %v995
    %1287 = vmatmul.mubr.bf16.gmra.mrb[0].mxu0 %v994
    %v1288 = vpop.f32.mrb[0].mxu0
    %v1289 = vadd.f32 0.0, %v1288
    %v1290 = vpop.f32.mrb[0].mxu0
    %v1291 = vpop.f32.mrb[0].mxu0
    %v1292 = vpop.f32.mrb[0].mxu0
    %1293 = vdwg.mxu0
    %1294 = vmatprep.subr.bf16.mxu0 0
    %1295 = vmatpush1.bf16.msra.mxu0 %v1206
    %1296 = vmatprep.subr.bf16.mxu0 0
    %1297 = vmatpush1.bf16.msra.mxu0 %v1207
    %1298 = vmatprep.subr.bf16.mxu0 0
    %1299 = vmatpush1.bf16.msra.mxu0 %v1208
    %1300 = vmatprep.subr.bf16.mxu0 0
    %1301 = vmatpush1.bf16.msra.mxu0 %v1209
    %1302 = vmatprep.subr.bf16.mxu0 0
    %1303 = vmatpush1.bf16.msra.mxu0 %v1210
    %1304 = vmatprep.subr.bf16.mxu0 0
    %1305 = vmatpush1.bf16.msra.mxu0 %v1211
    %1306 = vmatprep.subr.bf16.mxu0 0
    %1307 = vmatpush1.bf16.msra.mxu0 %v1212
    %1308 = vmatprep.subr.bf16.mxu0 0
    %1309 = vmatpush1.bf16.msra.mxu0 %v1213
    %1310 = vmatprep.subr.bf16.mxu0 0
    %1311 = vmatpush1.bf16.msra.mxu0 %v1214
    %1312 = vmatprep.subr.bf16.mxu0 0
    %1313 = vmatpush1.bf16.msra.mxu0 %v1215
    %1314 = vmatprep.subr.bf16.mxu0 0
    %1315 = vmatpush1.bf16.msra.mxu0 %v1216
    %1316 = vmatprep.subr.bf16.mxu0 0
    %1317 = vmatpush1.bf16.msra.mxu0 %v1217
    %1318 = vmatprep.subr.bf16.mxu0 0
    %1319 = vmatpush1.bf16.msra.mxu0 %v1218
    %1320 = vmatprep.subr.bf16.mxu0 0
    %1321 = vmatpush1.bf16.msra.mxu0 %v1219
    %1322 = vmatprep.subr.bf16.mxu0 0
    %1323 = vmatpush1.bf16.msra.mxu0 %v1220
    %1324 = vmatprep.subr.bf16.mxu0 0
    %1325 = vmatpush1.bf16.msra.mxu0 %v1221
    %1326 = vmatprep.mubr.bf16.mxu0 %v997
    %1327 = vmatmul.mubr.bf16.gmra.mrb[0].mxu0 %v996
    %v1328 = vpop.f32.mrb[0].mxu0
    %v1329 = vadd.f32 %v1289, %v1328
    %v1330 = vpop.f32.mrb[0].mxu0
    %v1331 = vpop.f32.mrb[0].mxu0
    %v1332 = vpop.f32.mrb[0].mxu0
    %1333 = vdwg.mxu0
    %v1334 = vmul.f32 %v987, %v987
    %v1335 = vmul.f32 %v989, %v989
    %v1336 = vmul.f32 %v991, %v991
    %v1337 = vmul.f32 %v993, %v993
    %v1338 = vadd.f32 %v1334, %v1335
    %v1339 = vadd.f32 %v1338, %v1336
    %v1340 = vadd.f32 %v1339, %v1337
    %1341 = vadd.xlane.f32.xlu0 %v1340
    %v1342 = vpop.xlane.xlu0 %1341
    %v1343 = vmax.f32 %v1342, 1e-24
    %v1344 = vrsqrt.pop %v1343
    %v1345 = vmul.f32 %v1329, %v1344
    %1347 = vrot.lane.b32.xlu0 %v1345, 118
    %v1348 = vpop.permute.xlu0 %1347
    %v1350 = vmax.f32 %v1345, %v1348
    %1351 = vrot.lane.b32.xlu0 %v1345, 108
    %v1352 = vpop.permute.xlu0 %1351
    %v1354 = vmax.f32 %v1350, %v1352
    %v1355 = vmul.f32 %v1354, 20.0
    %v1356 = vxor.u32 %v1355, 2147483648
    %v1357 = vmul.f32 %v1356, 1.442695
    %v1358 = vpow.pop %v1357
    %v1359 = vadd.f32 %v1358, 1.0
    %v1360 = vrcp.pop %v1359
    %v1361 = vmul.f32 1.0, %v1360
    %vm1362 = vcmask 80896
    %1363 = vst.msk [vmem:[#allocation5] sm:$0xff] %vm1362, %v1361
    // Predicated region
    $region18: #{adsnet_classifier_forward.1} parent=1 // pred_check
      _
    $region19: #{adsnet_classifier_forward.1} parent=1 // pred_check_branch
      %1365 = sbr.rel (0) target = $region21
    $region20: #{adsnet_classifier_forward.1} parent=1 // pred_region
      %s1367 = ssub.s32 128, 128
      %1368 = vsyncadd [#allocation4], %s1367
      %s1370 = sshll.u32 [#allocation5], 4
      %s1371 = int_to_ptr.vmem [resolvable:$true] %s1370
      %1373 = dma.vmem_to_hbm [thread:$0]  %s1371, 128, %s3, [#allocation4]
    $region21: #{adsnet_classifier_forward.1} parent=1 // pred_fallthru
      _
    // Predicated region
    $region22: #{adsnet_classifier_forward.1} parent=1 // pred_check
      _
    $region23: #{adsnet_classifier_forward.1} parent=1 // pred_check_branch
      %1375 = sbr.rel (0) target = $region25
    $region24: #{adsnet_classifier_forward.1} parent=1 // pred_region
      %1376 = dma.done [#allocation4], 128
    $region25: #{adsnet_classifier_forward.1} parent=1 // pred_fallthru
      _
    %1377 = vsyncpa [#allocation3], 1
    %1378 = vsyncpa [#allocation4], 1

</llo_original>
